<compile_context>
chip_gen: v5e
topology: v5e:2x2
jax: 0.10.0
libtpu: 0.0.40
codegen_flags: <defaults>
</compile_context>

<pallas_src>
import functools

import jax
import jax.numpy as jnp
from jax import lax
from jax.experimental import pallas as pl
from jax.experimental.pallas import tpu as pltpu


def _focal_nll_kernel(x_ref, tgt_ref, out_ref, *, gamma, reduction, total_n):
    """One (TN, C) tile: gather target column, gamma-modulate, reduce."""
    i = pl.program_id(0)
    x = x_ref[...]                                  # (TN, C), native dtype
    tgt = tgt_ref[...]                              # (TN, 1) int32
    tn, c = x.shape

    # --- Gather target column per row BEFORE any transcendental work. -------
    # One-hot select + lane reduction; exactly one nonzero per row, so the sum
    # is exact even in bf16.  Cast only the gathered column to f32.
    col_ids = lax.broadcasted_iota(jnp.int32, (tn, c), 1)
    picked = jnp.sum(
        jnp.where(col_ids == tgt, x, jnp.zeros_like(x)),
        axis=1, keepdims=True,
    ).astype(jnp.float32)                           # (TN, 1) = log p_t
    # NOTE: out-of-range target indices silently contribute 0 (one-hot never
    # matches) instead of erroring like torch.nn.NLLLoss.

    # --- gamma specialization (gamma is a trace-time Python value). ---------
    if gamma == 0:
        # (1 - p)^0 == 1 everywhere (torch pow semantics): plain NLL.
        loss = -picked
    elif float(gamma).is_integer() and 0 < int(gamma) <= 16:
        # Integer exponent: chained VPU multiplies, no EUP pow, no NaN hazard.
        base = 1.0 - jnp.exp(picked)
        mod = base
        for _ in range(int(gamma) - 1):
            mod = mod * base
        loss = -(mod * picked)
    else:
        # Float exponent: pow lowers to exp(g*log(.)); clamp base >= 0 so fp
        # noise (log-prob slightly > 0) cannot produce NaN.
        base = jnp.maximum(1.0 - jnp.exp(picked), 0.0)
        mod = jnp.power(base, jnp.float32(gamma))
        loss = -(mod * picked)                      # (TN, 1) f32

    if reduction == "none":
        out_ref[...] = loss
    else:
        # Mask padded / out-of-bounds tail rows against the TRUE N, then emit a
        # per-tile partial sum (final sum + mean-division happen in the wrapper
        # so the grid axis can stay "parallel").
        row_ids = i * tn + lax.broadcasted_iota(jnp.int32, (tn, 1), 0)
        valid = row_ids < total_n
        partial = jnp.sum(jnp.where(valid, loss, 0.0))
        out_ref[...] = jnp.full(out_ref.shape, partial, dtype=out_ref.dtype)


def focal_loss(input_tensor, target_tensor, *, gamma=0.0, reduction="mean",
               block_rows=512):
    """JAX wrapper mirroring FocalLoss(weight=None, gamma, reduction).forward."""
    # TODO(synk): per-class `weight` of nn.NLLLoss and >2-D (N, C, d1, ...)
    # inputs not implemented (module default is weight=None, (N, C) usage).
    assert input_tensor.ndim == 2, "expected (N, C) log-probabilities"
    n, c = input_tensor.shape
    x = input_tensor                                # keep native dtype (bf16 ok)
    tgt = target_tensor.reshape(n, 1).astype(jnp.int32)

    # Pad rows up to a sublane multiple (8) only if needed; padded rows are
    # masked out inside the kernel / sliced off in the wrapper.
    n_pad = max(8, ((n + 7) // 8) * 8)
    if n_pad != n:
        x = jnp.pad(x, ((0, n_pad - n), (0, 0)))
        tgt = jnp.pad(tgt, ((0, n_pad - n), (0, 0)))

    # Row-tile size: largest multiple of 8 keeping the double-buffered input
    # under a conservative budget (safe on v5e 16MiB / v6e 32MiB / v7x 32MiB
    # scoped VMEM, and well within v7x's 64MiB physical VMEM).
    itemsize = jnp.dtype(x.dtype).itemsize
    budget = 8 * 1024 * 1024                        # bytes for 2x input buffers
    tn = max(8, min(n_pad, block_rows,
                    (budget // (2 * c * itemsize) // 8) * 8))
    num_tiles = pl.cdiv(n_pad, tn)

    kernel = functools.partial(_focal_nll_kernel, gamma=gamma,
                               reduction=reduction, total_n=n)

    in_specs = [
        pl.BlockSpec((tn, c), lambda i: (i, 0)),    # log-probs tile
        pl.BlockSpec((tn, 1), lambda i: (i, 0)),    # targets tile
    ]
    if reduction == "none":
        # TODO(synk): lane-dense (1, TN) per-row output layout skipped (needs a
        # sublane->lane relayout); stores are only ~1/C of the traffic here.
        out_shape = jax.ShapeDtypeStruct((n_pad, 1), jnp.float32)
        out_spec = pl.BlockSpec((tn, 1), lambda i: (i, 0))
    else:
        # One (8,128) slab of the per-tile partial sum per grid step.
        out_shape = jax.ShapeDtypeStruct((num_tiles, 8, 128), jnp.float32)
        out_spec = pl.BlockSpec((1, 8, 128), lambda i: (i, 0, 0))

    result = pl.pallas_call(
        kernel,
        out_shape=out_shape,
        grid=(num_tiles,),
        in_specs=in_specs,
        out_specs=out_spec,
        compiler_params=pltpu.CompilerParams(
            dimension_semantics=("parallel",),       # shards tiles across TCs on v7x
            vmem_limit_bytes=32 * 1024 * 1024,
        ),
    )(x, tgt)

    if reduction == "none":
        return result[:n, 0]
    total = jnp.sum(result[:, 0, 0])
    if reduction == "mean":
        total = total / jnp.float32(n)               # divide by TRUE N
    return total


def _focal_loss_ref(x, t, gamma=0.0, reduction="mean"):
    xt = jnp.take_along_axis(x.astype(jnp.float32),
                             t[:, None].astype(jnp.int32), axis=1)[:, 0]
    prob_t = jnp.exp(xt)
    per_row = -(jnp.power(1.0 - prob_t, gamma) * xt) if gamma != 0 else -xt
    if reduction == "mean":
        return jnp.mean(per_row)
    if reduction == "sum":
        return jnp.sum(per_row)
    return per_row


if __name__ == "__main__":
    key = jax.random.PRNGKey(0)
    k_logits, k_tgt, k_logits2, k_tgt2 = jax.random.split(key, 4)

    N, C = 16, 32
    logits = jax.random.normal(k_logits, (N, C), dtype=jnp.float32)
    log_probs = jax.nn.log_softmax(logits, axis=-1)   # NLLLoss expects log-probs
    targets = jax.random.randint(k_tgt, (N,), 0, C, dtype=jnp.int32)

    # Default module config: weight=None, gamma=0.0, reduction='mean'.
    out = jax.block_until_ready(focal_loss(log_probs, targets,
                                           gamma=0.0, reduction="mean"))
    ref = _focal_loss_ref(log_probs, targets, gamma=0.0, reduction="mean")
    assert jnp.allclose(out, ref, atol=1e-5, rtol=1e-5), (out, ref)

    # Integer gamma (VPU-multiply path), mean reduction.
    out2 = jax.block_until_ready(focal_loss(log_probs, targets,
                                            gamma=2.0, reduction="mean"))
    ref2 = _focal_loss_ref(log_probs, targets, gamma=2.0, reduction="mean")
    assert jnp.allclose(out2, ref2, atol=1e-5, rtol=1e-5), (out2, ref2)

    # Float gamma (clamped pow path), sum reduction.
    out3 = jax.block_until_ready(focal_loss(log_probs, targets,
                                            gamma=1.5, reduction="sum"))
    ref3 = _focal_loss_ref(log_probs, targets, gamma=1.5, reduction="sum")
    assert jnp.allclose(out3, ref3, atol=1e-4, rtol=1e-5), (out3, ref3)

    # reduction='none' and a non-multiple-of-8 batch to exercise pad/mask path.
    N2 = 13
    logits2 = jax.random.normal(k_logits2, (N2, C), dtype=jnp.float32)
    log_probs2 = jax.nn.log_softmax(logits2, axis=-1)
    targets2 = jax.random.randint(k_tgt2, (N2,), 0, C, dtype=jnp.int32)
    out4 = jax.block_until_ready(focal_loss(log_probs2, targets2,
                                            gamma=2.0, reduction="none"))
    ref4 = _focal_loss_ref(log_probs2, targets2, gamma=2.0, reduction="none")
    assert out4.shape == (N2,)
    assert jnp.allclose(out4, ref4, atol=1e-5, rtol=1e-5), (out4, ref4)
    out5 = jax.block_until_ready(focal_loss(log_probs2, targets2,
                                            gamma=2.0, reduction="mean"))
    ref5 = _focal_loss_ref(log_probs2, targets2, gamma=2.0, reduction="mean")
    assert jnp.allclose(out5, ref5, atol=1e-5, rtol=1e-5), (out5, ref5)

    print("KERNEL_OK")
</pallas_src>

<mosaic_0001>
module attributes {stable_mosaic.version = 11 : i64} {
  func.func @_focal_nll_kernel(%arg0: i32, %arg1: memref<16x32xf32, #tpu.memory_space<vmem>>, %arg2: memref<16x1xi32, #tpu.memory_space<vmem>>, %arg3: memref<1x8x128xf32, #tpu.memory_space<vmem>>) attributes {dimension_semantics = [#tpu.dimension_semantics<parallel>], iteration_bounds = array<i64: 1>, scalar_prefetch = 0 : i64, scratch_operands = 0 : i64, tpu.core_type = #tpu.core_type<tc>, window_params = [{transform_indices = @transform_0, window_bounds = array<i64: 16, 32>}, {transform_indices = @transform_1, window_bounds = array<i64: 16, 1>}, {transform_indices = @transform_2, window_bounds = array<i64: 1, 8, 128>}]} {
    %c0 = arith.constant 0 : index
    %c0_0 = arith.constant 0 : index
    %0 = vector.load %arg1[%c0, %c0_0] : memref<16x32xf32, #tpu.memory_space<vmem>>, vector<16x32xf32>
    %c0_1 = arith.constant 0 : index
    %c0_2 = arith.constant 0 : index
    %1 = vector.load %arg2[%c0_1, %c0_2] : memref<16x1xi32, #tpu.memory_space<vmem>>, vector<16x1xi32>
    %2 = tpu.iota {dimensions = array<i32: 1>} : vector<16x32xi32>
    %3 = vector.broadcast %1 : vector<16x1xi32> to vector<16x32xi32>
    %4 = arith.cmpi eq, %2, %3 : vector<16x32xi32>
    %cst = arith.constant 0.000000e+00 : f32
    %5 = vector.broadcast %cst : f32 to vector<16x32xf32>
    %6 = arith.select %4, %0, %5 : vector<16x32xi1>, vector<16x32xf32>
    %cst_3 = arith.constant dense<0.000000e+00> : vector<16xf32>
    %7 = vector.multi_reduction <add>, %6, %cst_3 [1] : vector<16x32xf32> to vector<16xf32>
    %8 = vector.shape_cast %7 : vector<16xf32> to vector<16x1xf32>
    %cst_4 = arith.constant 0.000000e+00 : f32
    %9 = vector.broadcast %cst_4 : f32 to vector<16x1xf32>
    %10 = arith.subf %9, %8 : vector<16x1xf32>
    %c16_i32 = arith.constant 16 : i32
    %11 = arith.muli %arg0, %c16_i32 : i32
    %12 = tpu.iota {dimensions = array<i32: 0>} : vector<16x1xi32>
    %13 = vector.broadcast %11 : i32 to vector<16x1xi32>
    %14 = arith.addi %13, %12 : vector<16x1xi32>
    %c16_i32_5 = arith.constant 16 : i32
    %15 = vector.broadcast %c16_i32_5 : i32 to vector<16x1xi32>
    %16 = arith.cmpi slt, %14, %15 : vector<16x1xi32>
    %cst_6 = arith.constant 0.000000e+00 : f32
    %17 = vector.broadcast %cst_6 : f32 to vector<16x1xf32>
    %18 = arith.select %16, %10, %17 : vector<16x1xi1>, vector<16x1xf32>
    %19 = vector.shape_cast %18 : vector<16x1xf32> to vector<1x16x1xf32>
    %cst_7 = arith.constant dense<0.000000e+00> : vector<1xf32>
    %20 = vector.multi_reduction <add>, %19, %cst_7 [1, 2] : vector<1x16x1xf32> to vector<1xf32>
    %21 = vector.shape_cast %20 : vector<1xf32> to vector<1x1x1xf32>
    %22 = vector.extract %21[0, 0, 0] : f32 from vector<1x1x1xf32>
    %23 = vector.broadcast %22 : f32 to vector<1x8x128xf32>
    %c0_8 = arith.constant 0 : index
    %c0_9 = arith.constant 0 : index
    %c0_10 = arith.constant 0 : index
    %24 = vector.load %arg3[%c0_8, %c0_9, %c0_10] : memref<1x8x128xf32, #tpu.memory_space<vmem>>, vector<1x8x128xf32>
    tpu.vector_store %arg3[%c0_8, %c0_9, %c0_10], %23 {strides = array<i32>} : memref<1x8x128xf32, #tpu.memory_space<vmem>>, vector<1x8x128xf32>,
    return
  }
  func.func @transform_0(%arg0: i32) -> (i32, i32) {
    %c0_i32 = arith.constant 0 : i32
    %c0_i32_0 = arith.constant 0 : i32
    return %arg0, %c0_i32 : i32, i32
  }
  func.func @transform_1(%arg0: i32) -> (i32, i32) {
    %c0_i32 = arith.constant 0 : i32
    %c0_i32_0 = arith.constant 0 : i32
    return %arg0, %c0_i32 : i32, i32
  }
  func.func @transform_2(%arg0: i32) -> (i32, i32, i32) {
    %c0_i32 = arith.constant 0 : i32
    %c0_i32_0 = arith.constant 0 : i32
    %c0_i32_1 = arith.constant 0 : i32
    return %arg0, %c0_i32, %c0_i32_0 : i32, i32, i32
  }
}

</mosaic_0001>

<llo_original>
// kernel: tpu_custom_call.1
$region0: #{tpu_custom_call.1}
  #allocation0 [shape = 'u32[]', space=smem, size = 0x4, offset = 0x4, fixed_abs, tag = 'smem constant byte address 0x4 - core index']
  #allocation1 [shape = 'u32[72,128]{1,0:T(1,128)}', space=vmem, size = 0x9000, scoped, tag = 'internal scratch']
  %s0 = inlined_call_operand.vmem [shape: f32[16,32], index: 0, kind: input, shape index: {}]
  %s1 = inlined_call_operand.vmem [shape: s32[16,1], index: 1, kind: input, shape index: {}]
  %s2 = inlined_call_operand.hbm [shape: f32[1,8,128], index: 2, kind: output, shape index: {}]
  %s3 = sld [smem:[#allocation0]]
  $region18: #{tpu_custom_call.1} parent=0
    _
  %s5 = ssub.s32 1, %s3
  %s6 = scalar_select 0, %s5, %s3
  $region1: #{tpu_custom_call.1} parent=0
    #allocation2 [shape = 'u8[4096]{0}', space=vmem, size = 0x1000, scoped, tag = 'output window, operand 0, single buffered']
    #allocation3 [shape = 's32[1]{0}', space=sflag, size = 0x4, scoped, tag = 'scoped memory for tpu_custom_call.1']
    %7 = vsyncpa [#allocation3], 0
    // Predicated region
    $region2: #{tpu_custom_call.1} parent=1 // pred_check
      _
    $region3: #{tpu_custom_call.1} parent=1 // pred_check_branch
      %9 = sbr.rel (0) target = $region5
    $region4: #{tpu_custom_call.1} parent=1 // pred_region
      _
    $region5: #{tpu_custom_call.1} parent=1 // pred_fallthru
      _
    // Predicated region
    $region6: #{tpu_custom_call.1} parent=1 // pred_check
      _
    $region7: #{tpu_custom_call.1} parent=1 // pred_check_branch
      %11 = sbr.rel (0) target = $region9
    $region8: #{tpu_custom_call.1} parent=1 // pred_region
      _
    $region9: #{tpu_custom_call.1} parent=1 // pred_fallthru
      _
    %v12 = vld [vmem:[%s0] sm:$0xff]
    %v13 = vld [vmem:[%s0 + $0x8] sm:$0xff]
    %v14 = vld [vmem:[%s1] sm:$0xff]
    %v15 = vld [vmem:[%s1 + $0x8] sm:$0xff]
    %v16 = vlaneseq
    %v17 = vand.u32 %v16, 127
    %18 = vset.pattern.permute.xlu0 0
    %19 = vperm.xlu0 %18, %v14
    %v20 = vpop.permute.xlu0 %19
    %21 = vset.pattern.permute.xlu0 0
    %22 = vperm.xlu0 %21, %v15
    %v23 = vpop.permute.xlu0 %22
    %vm24 = vcmp.eq.s32.totalorder %v17, %v20
    %vm25 = vcmp.eq.s32.totalorder %v17, %v23
    %v26 = vsel %vm24, %v12, 0.0
    %v27 = vsel %vm25, %v13, 0.0
    %vm28 = vcmask 261120
    %v29 = vsel %vm28, %v26, 0.0
    %30 = vadd.xlane.f32.xlu0 %v29
    %v31 = vpop.xlane.xlu0 %30
    %v32 = vsel %vm28, %v27, 0.0
    %33 = vadd.xlane.f32.xlu0 %v32
    %v34 = vpop.xlane.xlu0 %33
    %v35 = vsub.f32 0.0, %v31
    %v36 = vsub.f32 0.0, %v34
    %s37 = smul.u32 0, 16
    %v38 = vlaneseq
    %v39 = vshrl.u32 %v38, 7
    %v40 = vadd.s32 %v39, 8
    %v41 = vstv %s37
    %v42 = vadd.s32 %v41, %v39
    %v43 = vadd.s32 %v41, %v40
    %vm44 = vcmp.lt.s32.totalorder %v42, 16
    %vm45 = vcmp.lt.s32.totalorder %v43, 16
    %v46 = vsel %vm44, %v35, 0.0
    %v47 = vsel %vm45, %v36, 0.0
    %vm48 = vcmask 7168
    %v49 = vsel %vm48, %v46, 0.0
    %v50 = vsel %vm48, %v47, 0.0
    %v51 = vadd.f32 %v49, %v50
    %52 = vadd.xlane.f32.xlu0 %v51
    %v53 = vpop.xlane.xlu0 %52
    %v54 = vrot.slane %v53, 4
    %v55 = vadd.f32 %v53, %v54
    %v56 = vrot.slane %v55, 2
    %v57 = vadd.f32 %v55, %v56
    %v58 = vrot.slane %v57, 1
    %v59 = vadd.f32 %v57, %v58
    %s60 = vtos %v59
    %v61 = vstv %s60
    %62 = vst [vmem:[#allocation2] sm:$0xff] %v61
    // Predicated region
    $region10: #{tpu_custom_call.1} parent=1 // pred_check
      _
    $region11: #{tpu_custom_call.1} parent=1 // pred_check_branch
      %64 = sbr.rel (0) target = $region13
    $region12: #{tpu_custom_call.1} parent=1 // pred_region
      %66 = vsyncadd [#allocation3], 0
      %s68 = sshll.u32 [#allocation2], 4
      %s69 = int_to_ptr.vmem [resolvable:$true] %s68
      %s70 = sshll.u32 %s2, 4
      %s71 = int_to_ptr.hbm [resolvable:$true] %s70
      %73 = dma.vmem_to_hbm [thread:$0]  %s69, 128, %s71, [#allocation3]
    $region13: #{tpu_custom_call.1} parent=1 // pred_fallthru
      _
    // Predicated region
    $region14: #{tpu_custom_call.1} parent=1 // pred_check
      _
    $region15: #{tpu_custom_call.1} parent=1 // pred_check_branch
      %75 = sbr.rel (0) target = $region17
    $region16: #{tpu_custom_call.1} parent=1 // pred_region
      %77 = dma.done [#allocation3], 128
    $region17: #{tpu_custom_call.1} parent=1 // pred_fallthru
      _
    %78 = vsyncpa [#allocation3], 1

</llo_original>
